<compile_context>
chip_gen: v7x
topology: tpu7x:2x2x1
jax: 0.10.0
libtpu: 0.0.40
codegen_flags: <defaults>
</compile_context>

<pallas_src>
import jax
import jax.numpy as jnp
from jax import lax
from jax.experimental import pallas as pl
from jax.experimental.pallas import tpu as pltpu


# ----------------------------------------------------------------------------
# Fused Pallas kernel: conv3x3 (same, as banded MXU matmul) + ReLU + Euler add
#                      + flatten-ReLU + fully-connected
# ----------------------------------------------------------------------------
def _fused_mini_ode_kernel(x_ref, cm_ref, cb_ref, wfc_ref, bfc_ref, o_ref):
    """x_ref:   [bn, HW]        f32 VMEM  flattened single-channel image tile
       cm_ref:  [HW, HW]        f32 VMEM  banded conv matrix (grid-invariant)
       cb_ref:  [1]             f32 SMEM  conv bias scalar
       wfc_ref: [HW, out_size]  f32 VMEM  FC weight (grid-invariant)
       bfc_ref: [1, out_size]   f32 VMEM  FC bias
       o_ref:   [bn, out_size]  f32 VMEM  output tile
    """
    x = x_ref[...]

    # Conv2d(1, 1, 3, padding='same') as one banded MXU matmul + scalar bias.
    conv = jnp.dot(x, cm_ref[...], preferred_element_type=jnp.float32)
    conv = conv + cb_ref[0]

    # ODE block (explicit Euler, ts=[0, 1]):  h = x + relu(f(x))
    h = x + jnp.maximum(conv, 0.0)

    # flatten (already flat in this layout) + ReLU, then the FC layer (MXU).
    flat = jnp.maximum(h, 0.0)
    out = jnp.dot(flat, wfc_ref[...], preferred_element_type=jnp.float32)
    o_ref[...] = out + bfc_ref[...]


# ----------------------------------------------------------------------------
# Wrapper
# ----------------------------------------------------------------------------
def _round_up(n, m):
    return -(-n // m) * m


def _build_conv_matrix(conv_w, H, W):
    """Banded [HW, HW] matrix M with (x_flat @ M) == Conv2d(1,1,3,'same')(x)."""
    HW = H * W
    out_idx = jnp.arange(HW, dtype=jnp.int32)
    oi = out_idx // W
    oj = out_idx % W
    m = jnp.zeros((HW, HW), jnp.float32)
    w = conv_w.reshape(3, 3).astype(jnp.float32)
    for dh in (-1, 0, 1):
        for dw in (-1, 0, 1):
            ii = oi + dh
            jj = oj + dw
            valid = (ii >= 0) & (ii < H) & (jj >= 0) & (jj < W)
            in_idx = jnp.clip(ii, 0, H - 1) * W + jnp.clip(jj, 0, W - 1)
            m = m.at[in_idx, out_idx].add(
                jnp.where(valid, w[dh + 1, dw + 1], 0.0))
    return m


def mini_ode_net_forward(params, x_nchw):
    """x_nchw: [N, 1, H, W] -> [N, out_size] float32."""
    N, C, H, W = x_nchw.shape
    assert C == 1, "Mini_ODE_Net uses single-channel inputs"
    HW = H * W
    out_size = params["fc_w"].shape[0]

    # Lane-dense flattened activations (HW lanes).
    x_flat = x_nchw.reshape(N, HW).astype(jnp.float32)

    # Padding-tolerant batch tiling: never a tiny-tile or whole-batch fallback.
    bn = min(1024, _round_up(N, 8))
    n_pad = _round_up(N, bn)
    if n_pad != N:
        x_flat = jnp.pad(x_flat, ((0, n_pad - N), (0, 0)))
    grid = (n_pad // bn,)

    conv_mat = _build_conv_matrix(params["conv_w"], H, W)           # [HW, HW]
    conv_b = params["conv_b"].reshape(1).astype(jnp.float32)        # SMEM scalar
    wfc = params["fc_w"].T.astype(jnp.float32)                      # [HW, out]
    bfc = params["fc_b"].reshape(1, out_size).astype(jnp.float32)   # [1, out]

    out = pl.pallas_call(
        _fused_mini_ode_kernel,
        out_shape=jax.ShapeDtypeStruct((n_pad, out_size), jnp.float32),
        grid=grid,
        in_specs=[
            pl.BlockSpec((bn, HW), lambda i: (i, 0)),               # x tile
            pl.BlockSpec((HW, HW), lambda i: (0, 0)),               # conv matrix
            pl.BlockSpec(memory_space=pltpu.MemorySpace.SMEM),      # conv bias
            pl.BlockSpec((HW, out_size), lambda i: (0, 0)),         # FC weight
            pl.BlockSpec((1, out_size), lambda i: (0, 0)),          # FC bias
        ],
        out_specs=pl.BlockSpec((bn, out_size), lambda i: (i, 0)),
        compiler_params=pltpu.CompilerParams(
            dimension_semantics=("parallel",),
            vmem_limit_bytes=32 * 1024 * 1024),
    )(x_flat, conv_mat, conv_b, wfc, bfc)

    return out[:N] if n_pad != N else out


# ----------------------------------------------------------------------------
# Pure-JAX reference (numerical sanity check) and parameter init
# ----------------------------------------------------------------------------
def reference_forward(params, x_nchw):
    conv_w = params["conv_w"].reshape(1, 1, 3, 3).astype(jnp.float32)
    y = lax.conv_general_dilated(
        x_nchw.astype(jnp.float32), conv_w, window_strides=(1, 1),
        padding="SAME", dimension_numbers=("NCHW", "OIHW", "NCHW"),
        precision=lax.Precision.HIGHEST)
    y = y + params["conv_b"]
    h = x_nchw.astype(jnp.float32) + jnp.maximum(y, 0.0)
    flat = jnp.maximum(h.reshape(x_nchw.shape[0], -1), 0.0)
    return (jnp.dot(flat, params["fc_w"].T, precision=lax.Precision.HIGHEST)
            + params["fc_b"])


def init_params(key, input_size, output_size):
    H, W = input_size
    k1, k2, k3, k4 = jax.random.split(key, 4)
    lim_c = 1.0 / 3.0                                    # 1/sqrt(3*3*1)
    conv_w = jax.random.uniform(k1, (3, 3), jnp.float32, -lim_c, lim_c)
    conv_b = jax.random.uniform(k2, (), jnp.float32, -lim_c, lim_c)
    lim_f = 1.0 / float(H * W) ** 0.5
    fc_w = jax.random.uniform(k3, (output_size, H * W), jnp.float32, -lim_f, lim_f)
    fc_b = jax.random.uniform(k4, (output_size,), jnp.float32, -lim_f, lim_f)
    return {"conv_w": conv_w, "conv_b": conv_b, "fc_w": fc_w, "fc_b": fc_b}


if __name__ == "__main__":
    key = jax.random.PRNGKey(0)
    pkey, xkey = jax.random.split(key)
    H, W, out_size = 16, 16, 10
    params = init_params(pkey, (H, W), out_size)
    x = jax.random.normal(xkey, (2, 1, H, W), jnp.float32)

    fwd = jax.jit(mini_ode_net_forward)
    out = fwd(params, x)
    jax.block_until_ready(out)
    assert out.shape == (2, out_size)

    ref = reference_forward(params, x)
    max_err = float(jnp.max(jnp.abs(out - ref)))
    assert jnp.allclose(out, ref, atol=2e-3, rtol=2e-3), max_err
    print("KERNEL_OK")
</pallas_src>

<mosaic_0001>
module attributes {stable_mosaic.version = 11 : i64} {
  func.func private @main(%arg0: i32) attributes {dimension_semantics = [#tpu.dimension_semantics<core_parallel>], iteration_bounds = array<i64: 2>, tpu.core_type = #tpu.core_type<sc_scalar_subcore>, window_params = []} {
    return
  }
}

module attributes {stable_mosaic.version = 11 : i64} {
  func.func private @main(%arg0: i32) attributes {dimension_semantics = [#tpu.dimension_semantics<core_parallel>], iteration_bounds = array<i64: 2>, tpu.core_type = #tpu.core_type<sc_scalar_subcore>, window_params = []} {
    return
  }
}

module attributes {stable_mosaic.version = 11 : i64} {
  func.func @_fused_mini_ode_kernel(%arg0: i32, %arg1: memref<8x256xf32, #tpu.memory_space<vmem>>, %arg2: memref<256x256xf32, #tpu.memory_space<vmem>>, %arg3: memref<1xf32, #tpu.memory_space<smem>>, %arg4: memref<256x10xf32, #tpu.memory_space<vmem>>, %arg5: memref<1x10xf32, #tpu.memory_space<vmem>>, %arg6: memref<8x10xf32, #tpu.memory_space<vmem>>) attributes {dimension_semantics = [#tpu.dimension_semantics<parallel>], iteration_bounds = array<i64: 1>, scalar_prefetch = 0 : i64, scratch_operands = 0 : i64, tpu.core_type = #tpu.core_type<tc>, window_params = [{transform_indices = @transform_0, window_bounds = array<i64: 8, 256>}, {pipeline_mode = #tpu.pipeline_mode<synchronous>, transform_indices = @transform_1, window_bounds = array<i64: 256, 256>}, {transform_indices = @transform_2, window_bounds = array<i64: 1>}, {pipeline_mode = #tpu.pipeline_mode<synchronous>, transform_indices = @transform_3, window_bounds = array<i64: 256, 10>}, {pipeline_mode = #tpu.pipeline_mode<synchronous>, transform_indices = @transform_4, window_bounds = array<i64: 1, 10>}, {transform_indices = @transform_5, window_bounds = array<i64: 8, 10>}]} {
    %c0 = arith.constant 0 : index
    %c0_0 = arith.constant 0 : index
    %0 = vector.load %arg1[%c0, %c0_0] : memref<8x256xf32, #tpu.memory_space<vmem>>, vector<8x256xf32>
    %c0_1 = arith.constant 0 : index
    %c0_2 = arith.constant 0 : index
    %1 = vector.load %arg2[%c0_1, %c0_2] : memref<256x256xf32, #tpu.memory_space<vmem>>, vector<256x256xf32>
    %cst = arith.constant dense<0.000000e+00> : vector<8x256xf32>
    %2 = tpu.matmul %0, %1, %cst {dimension_numbers = #tpu.dot_dimension_numbers<[1], [0], [0], [1], [0, 0, 1, 1], [], []>} : vector<8x256xf32>, vector<256x256xf32>, vector<8x256xf32> -> vector<8x256xf32>
    %c0_3 = arith.constant 0 : index
    %3 = memref.load %arg3[%c0_3] : memref<1xf32, #tpu.memory_space<smem>>
    %4 = vector.broadcast %3 : f32 to vector<8x256xf32>
    %5 = arith.addf %2, %4 : vector<8x256xf32>
    %cst_4 = arith.constant 0.000000e+00 : f32
    %6 = vector.broadcast %cst_4 : f32 to vector<8x256xf32>
    %7 = arith.maximumf %5, %6 : vector<8x256xf32>
    %8 = arith.addf %0, %7 : vector<8x256xf32>
    %cst_5 = arith.constant 0.000000e+00 : f32
    %9 = vector.broadcast %cst_5 : f32 to vector<8x256xf32>
    %10 = arith.maximumf %8, %9 : vector<8x256xf32>
    %c0_6 = arith.constant 0 : index
    %c0_7 = arith.constant 0 : index
    %11 = vector.load %arg4[%c0_6, %c0_7] : memref<256x10xf32, #tpu.memory_space<vmem>>, vector<256x10xf32>
    %cst_8 = arith.constant dense<0.000000e+00> : vector<8x10xf32>
    %12 = tpu.matmul %10, %11, %cst_8 {dimension_numbers = #tpu.dot_dimension_numbers<[1], [0], [0], [1], [0, 0, 1, 1], [], []>} : vector<8x256xf32>, vector<256x10xf32>, vector<8x10xf32> -> vector<8x10xf32>
    %c0_9 = arith.constant 0 : index
    %c0_10 = arith.constant 0 : index
    %13 = vector.load %arg5[%c0_9, %c0_10] : memref<1x10xf32, #tpu.memory_space<vmem>>, vector<1x10xf32>
    %14 = vector.broadcast %13 : vector<1x10xf32> to vector<8x10xf32>
    %15 = arith.addf %12, %14 : vector<8x10xf32>
    %c0_11 = arith.constant 0 : index
    %c0_12 = arith.constant 0 : index
    %16 = vector.load %arg6[%c0_11, %c0_12] : memref<8x10xf32, #tpu.memory_space<vmem>>, vector<8x10xf32>
    tpu.vector_store %arg6[%c0_11, %c0_12], %15 {strides = array<i32>} : memref<8x10xf32, #tpu.memory_space<vmem>>, vector<8x10xf32>,
    return
  }
  func.func @transform_0(%arg0: i32) -> (i32, i32) {
    %c0_i32 = arith.constant 0 : i32
    %c0_i32_0 = arith.constant 0 : i32
    return %arg0, %c0_i32 : i32, i32
  }
  func.func @transform_1(%arg0: i32) -> (i32, i32) {
    %c0_i32 = arith.constant 0 : i32
    %c0_i32_0 = arith.constant 0 : i32
    %c0_i32_1 = arith.constant 0 : i32
    return %c0_i32, %c0_i32_0 : i32, i32
  }
  func.func @transform_2(%arg0: i32) -> i32 {
    %c0_i32 = arith.constant 0 : i32
    %c0_i32_0 = arith.constant 0 : i32
    return %c0_i32 : i32
  }
  func.func @transform_3(%arg0: i32) -> (i32, i32) {
    %c0_i32 = arith.constant 0 : i32
    %c0_i32_0 = arith.constant 0 : i32
    %c0_i32_1 = arith.constant 0 : i32
    return %c0_i32, %c0_i32_0 : i32, i32
  }
  func.func @transform_4(%arg0: i32) -> (i32, i32) {
    %c0_i32 = arith.constant 0 : i32
    %c0_i32_0 = arith.constant 0 : i32
    %c0_i32_1 = arith.constant 0 : i32
    return %c0_i32, %c0_i32_0 : i32, i32
  }
  func.func @transform_5(%arg0: i32) -> (i32, i32) {
    %c0_i32 = arith.constant 0 : i32
    %c0_i32_0 = arith.constant 0 : i32
    return %arg0, %c0_i32 : i32, i32
  }
}

</mosaic_0001>

<llo_original>
// kernel: mini_ode_net_forward.1
$region0: #{mini_ode_net_forward.1}
  #allocation0 [shape = 'u32[]', space=smem, size = 0x4, offset = 0x4, fixed_abs, tag = 'smem constant byte address 0x4 - core index']
  #allocation1 [shape = 'u32[144,128]{1,0:T(1,128)}', space=vmem, size = 0x12000, scoped, tag = 'internal scratch']
  #allocation2 [shape = 'f32[1]{0:T(128)S(6)}', space=smem, size = 0x200, scoped, tag = 'scoped memory for mini_ode_net_forward.1']
  %s0 = inlined_call_operand.vmem [shape: f32[8,256], index: 0, kind: input, shape index: {}]
  %s1 = inlined_call_operand.hbm [shape: f32[256,256], index: 1, kind: input, shape index: {}]
  %s2 = inlined_call_operand.<no memory space> [shape: f32[1], index: 2, kind: input, shape index: {}]
  %s3 = inlined_call_operand.vmem [shape: f32[256,10], index: 3, kind: input, shape index: {}]
  %s4 = inlined_call_operand.vmem [shape: f32[1,10], index: 4, kind: input, shape index: {}]
  %s5 = inlined_call_operand.vmem [shape: f32[8,10], index: 5, kind: output, shape index: {}]
  %s6 = sld [smem:[#allocation0]]
  $region34: #{mini_ode_net_forward.1} parent=0
    _
  %s8 = ssub.s32 1, %s6
  %s9 = scalar_select 0, %s8, %s6
  %10 = sst [smem:[#allocation2]] %s2
  $region1: #{mini_ode_net_forward.1} parent=0
    #allocation3 [shape = 'u8[262144]{0}', space=vmem, size = 0x40000, scoped, tag = 'input window, operand 1, single buffered']
    #allocation4 [shape = 's32[1]{0}', space=sflag, size = 0x4, scoped, tag = 'scoped memory for mini_ode_net_forward.1']
    %11 = vsyncpa [#allocation4], 0
    // Predicated region
    $region2: #{mini_ode_net_forward.1} parent=1 // pred_check
      _
    $region3: #{mini_ode_net_forward.1} parent=1 // pred_check_branch
      %13 = sbr.rel (0) target = $region5
    $region4: #{mini_ode_net_forward.1} parent=1 // pred_region
      _
    $region5: #{mini_ode_net_forward.1} parent=1 // pred_fallthru
      _
    // Predicated region
    $region6: #{mini_ode_net_forward.1} parent=1 // pred_check
      _
    $region7: #{mini_ode_net_forward.1} parent=1 // pred_check_branch
      %15 = sbr.rel (0) target = $region9
    $region8: #{mini_ode_net_forward.1} parent=1 // pred_region
      %s17 = ssub.s32 8192, 8192
      %18 = vsyncadd [#allocation4], %s17
      %s19 = sshll.u32 [#allocation3], 4
      %s20 = int_to_ptr.vmem [resolvable:$true] %s19
      %25 = dma.hbm_to_vmem [thread:$0]  %s1, 8192, %s20, [#allocation4], 256, 256, 16
    $region9: #{mini_ode_net_forward.1} parent=1 // pred_fallthru
      _
    // Predicated region
    $region10: #{mini_ode_net_forward.1} parent=1 // pred_check
      _
    $region11: #{mini_ode_net_forward.1} parent=1 // pred_check_branch
      %27 = sbr.rel (0) target = $region13
    $region12: #{mini_ode_net_forward.1} parent=1 // pred_region
      _
    $region13: #{mini_ode_net_forward.1} parent=1 // pred_fallthru
      _
    // Predicated region
    $region14: #{mini_ode_net_forward.1} parent=1 // pred_check
      _
    $region15: #{mini_ode_net_forward.1} parent=1 // pred_check_branch
      %29 = sbr.rel (0) target = $region17
    $region16: #{mini_ode_net_forward.1} parent=1 // pred_region
      _
    $region17: #{mini_ode_net_forward.1} parent=1 // pred_fallthru
      _
    // Predicated region
    $region18: #{mini_ode_net_forward.1} parent=1 // pred_check
      _
    $region19: #{mini_ode_net_forward.1} parent=1 // pred_check_branch
      %31 = sbr.rel (0) target = $region21
    $region20: #{mini_ode_net_forward.1} parent=1 // pred_region
      _
    $region21: #{mini_ode_net_forward.1} parent=1 // pred_fallthru
      _
    // Predicated region
    $region22: #{mini_ode_net_forward.1} parent=1 // pred_check
      _
    $region23: #{mini_ode_net_forward.1} parent=1 // pred_check_branch
      %33 = sbr.rel (0) target = $region25
    $region24: #{mini_ode_net_forward.1} parent=1 // pred_region
      %34 = dma.done [#allocation4], 8192
    $region25: #{mini_ode_net_forward.1} parent=1 // pred_fallthru
      _
    %v35 = vld [vmem:[%s0] sm:$0xff]
    %v36 = vld [vmem:[%s0 + $0x8] sm:$0xff]
    %v37 = vld [vmem:[#allocation3] sm:$0xff]
    %v38 = vld [vmem:[#allocation3 + $0x8] sm:$0xff]
    %v39 = vld [vmem:[#allocation3 + $0x10] sm:$0xff]
    %v40 = vld [vmem:[#allocation3 + $0x18] sm:$0xff]
    %v41 = vld [vmem:[#allocation3 + $0x20] sm:$0xff]
    %v42 = vld [vmem:[#allocation3 + $0x28] sm:$0xff]
    %v43 = vld [vmem:[#allocation3 + $0x30] sm:$0xff]
    %v44 = vld [vmem:[#allocation3 + $0x38] sm:$0xff]
    %v45 = vld [vmem:[#allocation3 + $0x40] sm:$0xff]
    %v46 = vld [vmem:[#allocation3 + $0x48] sm:$0xff]
    %v47 = vld [vmem:[#allocation3 + $0x50] sm:$0xff]
    %v48 = vld [vmem:[#allocation3 + $0x58] sm:$0xff]
    %v49 = vld [vmem:[#allocation3 + $0x60] sm:$0xff]
    %v50 = vld [vmem:[#allocation3 + $0x68] sm:$0xff]
    %v51 = vld [vmem:[#allocation3 + $0x70] sm:$0xff]
    %v52 = vld [vmem:[#allocation3 + $0x78] sm:$0xff]
    %v53 = vld [vmem:[#allocation3 + $0x80] sm:$0xff]
    %v54 = vld [vmem:[#allocation3 + $0x88] sm:$0xff]
    %v55 = vld [vmem:[#allocation3 + $0x90] sm:$0xff]
    %v56 = vld [vmem:[#allocation3 + $0x98] sm:$0xff]
    %v57 = vld [vmem:[#allocation3 + $0xa0] sm:$0xff]
    %v58 = vld [vmem:[#allocation3 + $0xa8] sm:$0xff]
    %v59 = vld [vmem:[#allocation3 + $0xb0] sm:$0xff]
    %v60 = vld [vmem:[#allocation3 + $0xb8] sm:$0xff]
    %v61 = vld [vmem:[#allocation3 + $0xc0] sm:$0xff]
    %v62 = vld [vmem:[#allocation3 + $0xc8] sm:$0xff]
    %v63 = vld [vmem:[#allocation3 + $0xd0] sm:$0xff]
    %v64 = vld [vmem:[#allocation3 + $0xd8] sm:$0xff]
    %v65 = vld [vmem:[#allocation3 + $0xe0] sm:$0xff]
    %v66 = vld [vmem:[#allocation3 + $0xe8] sm:$0xff]
    %v67 = vld [vmem:[#allocation3 + $0xf0] sm:$0xff]
    %v68 = vld [vmem:[#allocation3 + $0xf8] sm:$0xff]
    %v69 = vld [vmem:[#allocation3 + $0x100] sm:$0xff]
    %v70 = vld [vmem:[#allocation3 + $0x108] sm:$0xff]
    %v71 = vld [vmem:[#allocation3 + $0x110] sm:$0xff]
    %v72 = vld [vmem:[#allocation3 + $0x118] sm:$0xff]
    %v73 = vld [vmem:[#allocation3 + $0x120] sm:$0xff]
    %v74 = vld [vmem:[#allocation3 + $0x128] sm:$0xff]
    %v75 = vld [vmem:[#allocation3 + $0x130] sm:$0xff]
    %v76 = vld [vmem:[#allocation3 + $0x138] sm:$0xff]
    %v77 = vld [vmem:[#allocation3 + $0x140] sm:$0xff]
    %v78 = vld [vmem:[#allocation3 + $0x148] sm:$0xff]
    %v79 = vld [vmem:[#allocation3 + $0x150] sm:$0xff]
    %v80 = vld [vmem:[#allocation3 + $0x158] sm:$0xff]
    %v81 = vld [vmem:[#allocation3 + $0x160] sm:$0xff]
    %v82 = vld [vmem:[#allocation3 + $0x168] sm:$0xff]
    %v83 = vld [vmem:[#allocation3 + $0x170] sm:$0xff]
    %v84 = vld [vmem:[#allocation3 + $0x178] sm:$0xff]
    %v85 = vld [vmem:[#allocation3 + $0x180] sm:$0xff]
    %v86 = vld [vmem:[#allocation3 + $0x188] sm:$0xff]
    %v87 = vld [vmem:[#allocation3 + $0x190] sm:$0xff]
    %v88 = vld [vmem:[#allocation3 + $0x198] sm:$0xff]
    %v89 = vld [vmem:[#allocation3 + $0x1a0] sm:$0xff]
    %v90 = vld [vmem:[#allocation3 + $0x1a8] sm:$0xff]
    %v91 = vld [vmem:[#allocation3 + $0x1b0] sm:$0xff]
    %v92 = vld [vmem:[#allocation3 + $0x1b8] sm:$0xff]
    %v93 = vld [vmem:[#allocation3 + $0x1c0] sm:$0xff]
    %v94 = vld [vmem:[#allocation3 + $0x1c8] sm:$0xff]
    %v95 = vld [vmem:[#allocation3 + $0x1d0] sm:$0xff]
    %v96 = vld [vmem:[#allocation3 + $0x1d8] sm:$0xff]
    %v97 = vld [vmem:[#allocation3 + $0x1e0] sm:$0xff]
    %v98 = vld [vmem:[#allocation3 + $0x1e8] sm:$0xff]
    %v99 = vld [vmem:[#allocation3 + $0x1f0] sm:$0xff]
    %v100 = vld [vmem:[#allocation3 + $0x1f8] sm:$0xff]
    %s101 = sld [smem:[#allocation2]]
    %v102 = vstv %s101
    %103 = vmatprep.subr.mxu0 %v38
    %104 = vmatpush1.msra.mxu0 %v37
    %105 = vmatprep.subr.mxu0 %v40
    %106 = vmatpush1.msra.mxu0 %v39
    %107 = vmatprep.subr.mxu0 %v42
    %108 = vmatpush1.msra.mxu0 %v41
    %109 = vmatprep.subr.mxu0 %v44
    %110 = vmatpush1.msra.mxu0 %v43
    %111 = vmatprep.subr.mxu0 %v46
    %112 = vmatpush1.msra.mxu0 %v45
    %113 = vmatprep.subr.mxu0 %v48
    %114 = vmatpush1.msra.mxu0 %v47
    %115 = vmatprep.subr.mxu0 %v50
    %116 = vmatpush1.msra.mxu0 %v49
    %117 = vmatprep.subr.mxu0 %v52
    %118 = vmatpush1.msra.mxu0 %v51
    %119 = vmatprep.subr.mxu0 %v54
    %120 = vmatpush1.msra.mxu0 %v53
    %121 = vmatprep.subr.mxu0 %v56
    %122 = vmatpush1.msra.mxu0 %v55
    %123 = vmatprep.subr.mxu0 %v58
    %124 = vmatpush1.msra.mxu0 %v57
    %125 = vmatprep.subr.mxu0 %v60
    %126 = vmatpush1.msra.mxu0 %v59
    %127 = vmatprep.subr.mxu0 %v62
    %128 = vmatpush1.msra.mxu0 %v61
    %129 = vmatprep.subr.mxu0 %v64
    %130 = vmatpush1.msra.mxu0 %v63
    %131 = vmatprep.subr.mxu0 %v66
    %132 = vmatpush1.msra.mxu0 %v65
    %133 = vmatprep.subr.mxu0 %v68
    %134 = vmatpush1.msra.mxu0 %v67
    %135 = vmatprep.subr.mxu0 %v70
    %136 = vmatpush1.msra.mxu0 %v69
    %137 = vmatprep.subr.mxu0 %v72
    %138 = vmatpush1.msra.mxu0 %v71
    %139 = vmatprep.subr.mxu0 %v74
    %140 = vmatpush1.msra.mxu0 %v73
    %141 = vmatprep.subr.mxu0 %v76
    %142 = vmatpush1.msra.mxu0 %v75
    %143 = vmatprep.subr.mxu0 %v78
    %144 = vmatpush1.msra.mxu0 %v77
    %145 = vmatprep.subr.mxu0 %v80
    %146 = vmatpush1.msra.mxu0 %v79
    %147 = vmatprep.subr.mxu0 %v82
    %148 = vmatpush1.msra.mxu0 %v81
    %149 = vmatprep.subr.mxu0 %v84
    %150 = vmatpush1.msra.mxu0 %v83
    %151 = vmatprep.subr.mxu0 %v86
    %152 = vmatpush1.msra.mxu0 %v85
    %153 = vmatprep.subr.mxu0 %v88
    %154 = vmatpush1.msra.mxu0 %v87
    %155 = vmatprep.subr.mxu0 %v90
    %156 = vmatpush1.msra.mxu0 %v89
    %157 = vmatprep.subr.mxu0 %v92
    %158 = vmatpush1.msra.mxu0 %v91
    %159 = vmatprep.subr.mxu0 %v94
    %160 = vmatpush1.msra.mxu0 %v93
    %161 = vmatprep.subr.mxu0 %v96
    %162 = vmatpush1.msra.mxu0 %v95
    %163 = vmatprep.subr.mxu0 %v98
    %164 = vmatpush1.msra.mxu0 %v97
    %165 = vmatprep.subr.mxu0 %v100
    %166 = vmatpush1.msra.mxu0 %v99
    %167 = vmatprep.mubr.f32.mxu0 %v36
    %168 = vmatmul.mubr.f32.gmra.mrb[0].mxu0 %v35
    %v169 = vpop.f32.mrb[0].mxu0
    %v170 = vadd.f32 %v102, %v169
    %v171 = vpop.f32.mrb[0].mxu0
    %v172 = vadd.f32 %v102, %v171
    %173 = vdwg.mxu0
    %v174 = vmax.f32 %v170, 0.0
    %v175 = vmax.f32 %v172, 0.0
    %v176 = vadd.f32 %v35, %v174
    %v177 = vadd.f32 %v36, %v175
    %v178 = vmax.f32 %v176, 0.0
    %v179 = vmax.f32 %v177, 0.0
    %v180 = vld [vmem:[%s3] sm:$0xff]
    %v181 = vld [vmem:[%s3 + $0x8] sm:$0xff]
    %v182 = vld [vmem:[%s3 + $0x10] sm:$0xff]
    %v183 = vld [vmem:[%s3 + $0x18] sm:$0xff]
    %v184 = vld [vmem:[%s3 + $0x20] sm:$0xff]
    %v185 = vld [vmem:[%s3 + $0x28] sm:$0xff]
    %v186 = vld [vmem:[%s3 + $0x30] sm:$0xff]
    %v187 = vld [vmem:[%s3 + $0x38] sm:$0xff]
    %v188 = vld [vmem:[%s3 + $0x40] sm:$0xff]
    %v189 = vld [vmem:[%s3 + $0x48] sm:$0xff]
    %v190 = vld [vmem:[%s3 + $0x50] sm:$0xff]
    %v191 = vld [vmem:[%s3 + $0x58] sm:$0xff]
    %v192 = vld [vmem:[%s3 + $0x60] sm:$0xff]
    %v193 = vld [vmem:[%s3 + $0x68] sm:$0xff]
    %v194 = vld [vmem:[%s3 + $0x70] sm:$0xff]
    %v195 = vld [vmem:[%s3 + $0x78] sm:$0xff]
    %v196 = vld [vmem:[%s3 + $0x80] sm:$0xff]
    %v197 = vld [vmem:[%s3 + $0x88] sm:$0xff]
    %v198 = vld [vmem:[%s3 + $0x90] sm:$0xff]
    %v199 = vld [vmem:[%s3 + $0x98] sm:$0xff]
    %v200 = vld [vmem:[%s3 + $0xa0] sm:$0xff]
    %v201 = vld [vmem:[%s3 + $0xa8] sm:$0xff]
    %v202 = vld [vmem:[%s3 + $0xb0] sm:$0xff]
    %v203 = vld [vmem:[%s3 + $0xb8] sm:$0xff]
    %v204 = vld [vmem:[%s3 + $0xc0] sm:$0xff]
    %v205 = vld [vmem:[%s3 + $0xc8] sm:$0xff]
    %v206 = vld [vmem:[%s3 + $0xd0] sm:$0xff]
    %v207 = vld [vmem:[%s3 + $0xd8] sm:$0xff]
    %v208 = vld [vmem:[%s3 + $0xe0] sm:$0xff]
    %v209 = vld [vmem:[%s3 + $0xe8] sm:$0xff]
    %v210 = vld [vmem:[%s3 + $0xf0] sm:$0xff]
    %v211 = vld [vmem:[%s3 + $0xf8] sm:$0xff]
    %v212 = vld [vmem:[%s4] sm:$0x1]
    %v214 = vlaneseq
    %v215 = vshrl.u32 %v214, 7
    %v216 = vsub.s32 0, %v215
    %v217 = vrot.slane %v212, %v216
    %219 = vmatprep.subr.mxu0 0.0
    %220 = vmatpush1.msra.mxu0 %v180
    %221 = vmatprep.subr.mxu0 0.0
    %222 = vmatpush1.msra.mxu0 %v181
    %223 = vmatprep.subr.mxu0 0.0
    %224 = vmatpush1.msra.mxu0 %v182
    %225 = vmatprep.subr.mxu0 0.0
    %226 = vmatpush1.msra.mxu0 %v183
    %227 = vmatprep.subr.mxu0 0.0
    %228 = vmatpush1.msra.mxu0 %v184
    %229 = vmatprep.subr.mxu0 0.0
    %230 = vmatpush1.msra.mxu0 %v185
    %231 = vmatprep.subr.mxu0 0.0
    %232 = vmatpush1.msra.mxu0 %v186
    %233 = vmatprep.subr.mxu0 0.0
    %234 = vmatpush1.msra.mxu0 %v187
    %235 = vmatprep.subr.mxu0 0.0
    %236 = vmatpush1.msra.mxu0 %v188
    %237 = vmatprep.subr.mxu0 0.0
    %238 = vmatpush1.msra.mxu0 %v189
    %239 = vmatprep.subr.mxu0 0.0
    %240 = vmatpush1.msra.mxu0 %v190
    %241 = vmatprep.subr.mxu0 0.0
    %242 = vmatpush1.msra.mxu0 %v191
    %243 = vmatprep.subr.mxu0 0.0
    %244 = vmatpush1.msra.mxu0 %v192
    %245 = vmatprep.subr.mxu0 0.0
    %246 = vmatpush1.msra.mxu0 %v193
    %247 = vmatprep.subr.mxu0 0.0
    %248 = vmatpush1.msra.mxu0 %v194
    %249 = vmatprep.subr.mxu0 0.0
    %250 = vmatpush1.msra.mxu0 %v195
    %251 = vmatprep.subr.mxu0 0.0
    %252 = vmatpush1.msra.mxu0 %v196
    %253 = vmatprep.subr.mxu0 0.0
    %254 = vmatpush1.msra.mxu0 %v197
    %255 = vmatprep.subr.mxu0 0.0
    %256 = vmatpush1.msra.mxu0 %v198
    %257 = vmatprep.subr.mxu0 0.0
    %258 = vmatpush1.msra.mxu0 %v199
    %259 = vmatprep.subr.mxu0 0.0
    %260 = vmatpush1.msra.mxu0 %v200
    %261 = vmatprep.subr.mxu0 0.0
    %262 = vmatpush1.msra.mxu0 %v201
    %263 = vmatprep.subr.mxu0 0.0
    %264 = vmatpush1.msra.mxu0 %v202
    %265 = vmatprep.subr.mxu0 0.0
    %266 = vmatpush1.msra.mxu0 %v203
    %267 = vmatprep.subr.mxu0 0.0
    %268 = vmatpush1.msra.mxu0 %v204
    %269 = vmatprep.subr.mxu0 0.0
    %270 = vmatpush1.msra.mxu0 %v205
    %271 = vmatprep.subr.mxu0 0.0
    %272 = vmatpush1.msra.mxu0 %v206
    %273 = vmatprep.subr.mxu0 0.0
    %274 = vmatpush1.msra.mxu0 %v207
    %275 = vmatprep.subr.mxu0 0.0
    %276 = vmatpush1.msra.mxu0 %v208
    %277 = vmatprep.subr.mxu0 0.0
    %278 = vmatpush1.msra.mxu0 %v209
    %279 = vmatprep.subr.mxu0 0.0
    %280 = vmatpush1.msra.mxu0 %v210
    %281 = vmatprep.subr.mxu0 0.0
    %282 = vmatpush1.msra.mxu0 %v211
    %283 = vmatprep.mubr.f32.mxu0 %v179
    %284 = vmatmul.mubr.f32.gmra.mrb[0].mxu0 %v178
    %v285 = vpop.f32.mrb[0].mxu0
    %v286 = vadd.f32 %v217, %v285
    %v287 = vpop.f32.mrb[0].mxu0
    %288 = vdwg.mxu0
    %vm289 = vcmask 80896
    %290 = vst.msk [vmem:[%s5] sm:$0xff] %vm289, %v286
    // Predicated region
    $region26: #{mini_ode_net_forward.1} parent=1 // pred_check
      _
    $region27: #{mini_ode_net_forward.1} parent=1 // pred_check_branch
      %292 = sbr.rel (0) target = $region29
    $region28: #{mini_ode_net_forward.1} parent=1 // pred_region
      _
    $region29: #{mini_ode_net_forward.1} parent=1 // pred_fallthru
      _
    // Predicated region
    $region30: #{mini_ode_net_forward.1} parent=1 // pred_check
      _
    $region31: #{mini_ode_net_forward.1} parent=1 // pred_check_branch
      %294 = sbr.rel (0) target = $region33
    $region32: #{mini_ode_net_forward.1} parent=1 // pred_region
      _
    $region33: #{mini_ode_net_forward.1} parent=1 // pred_fallthru
      _
    %295 = vsyncpa [#allocation4], 1

</llo_original>
